<compile_context>
chip_gen: v5e
topology: v5e:2x2
jax: 0.10.0
libtpu: 0.0.40
codegen_flags: <defaults>
</compile_context>

<pallas_src>
import functools

import jax
import jax.numpy as jnp
from jax.experimental import pallas as pl
from jax.experimental.pallas import tpu as pltpu


def _lsce_kernel(pred_ref, tgt_ref, loss_ref, *, smoothing, n_classes, n_rows):
    # pred_ref: (Bt, N) logits tile (last block may be ragged / contain garbage)
    # tgt_ref:  (Bt, 1) int32 targets
    # loss_ref: (Bt, 1) per-row smoothed NLL (0 for rows >= n_rows)
    step = pl.program_id(0)
    bt, n = pred_ref.shape

    # f32 accumulation (no-op cast for f32 inputs).
    x = pred_ref[...].astype(jnp.float32)                            # (Bt, N)

    # Stable log-softmax statistics; logp itself is never materialized.
    m = jnp.max(x, axis=-1, keepdims=True)                           # (Bt, 1)
    lse = jnp.log(jnp.sum(jnp.exp(x - m), axis=-1, keepdims=True))   # (Bt, 1)
    log_z = m + lse                                                  # (Bt, 1)
    sum_x = jnp.sum(x, axis=-1, keepdims=True)                       # (Bt, 1)

    # Target logit via iota == target mask (replaces torch scatter_).
    cols = jax.lax.broadcasted_iota(jnp.int32, (bt, n), 1)
    is_tgt = cols == tgt_ref[...]                                    # (Bt, N)
    tgt_x = jnp.sum(jnp.where(is_tgt, x, 0.0), axis=-1, keepdims=True)

    tgt_lp = tgt_x - log_z                                           # (Bt, 1)
    sum_lp = sum_x - n_classes * log_z                               # (Bt, 1)

    off_w = smoothing / (n_classes - 1)
    loss_rows = -(1.0 - smoothing) * tgt_lp - off_w * (sum_lp - tgt_lp)

    # Zero out rows belonging to the ragged last block (garbage logits/targets
    # there never propagate: rows are independent and jnp.where selects 0).
    row_ids = step * bt + jax.lax.broadcasted_iota(jnp.int32, (bt, 1), 0)
    loss_rows = jnp.where(row_ids < n_rows, loss_rows, 0.0)

    loss_ref[...] = loss_rows.astype(loss_ref.dtype)


def _vmem_capacity_bytes():
    """Physical VMEM per core; conservative (v7x-sized) fallback."""
    try:
        return int(pltpu.get_tpu_info().vmem_capacity_bytes)
    except Exception:
        return 64 * 1024 * 1024


def _choose_tiling(b, n):
    """Pick (row_tile, vmem_limit_bytes).

    Working set per grid step is ~4 tile-sized f32 buffers (double-buffered
    input + a couple of fused intermediates), so the per-tile budget is a
    quarter of the scoped-VMEM limit we request. No hard row cap: the tile is
    sized purely by bytes, then capped by the batch and by the >=2-grid-steps
    rule (so v7x megacore sharding has work for both cores).
    """
    vmem_cap = _vmem_capacity_bytes()
    vmem_limit = min(int(vmem_cap * 3 // 4), 96 * 1024 * 1024)  # 48 MiB on v7x, 96 on v5e/v6e
    tile_budget = vmem_limit // 4                               # f32 bytes per logits tile

    rows = max(8, tile_budget // (max(n, 1) * 4))
    bt = max(8, (rows // 8) * 8)

    b8 = ((b + 7) // 8) * 8
    bt = min(bt, b8)
    if b8 > 8 and bt >= b8:  # keep at least 2 grid steps when the batch allows
        bt = min(bt, ((b8 // 2 + 7) // 8) * 8)
    return bt, vmem_limit


def label_smoothing_cross_entropy(pred, target, smoothing=0.1):
    """pred: (B, N) logits. target: (B,) integer class ids. Returns scalar loss."""
    B, N = pred.shape
    bt, vmem_limit = _choose_tiling(B, N)
    grid = pl.cdiv(B, bt)  # no host padding of the logits; ragged last block is masked

    tgt2d = target.astype(jnp.int32).reshape(B, 1)

    kernel = functools.partial(
        _lsce_kernel, smoothing=float(smoothing), n_classes=N, n_rows=B)

    per_row = pl.pallas_call(
        kernel,
        out_shape=jax.ShapeDtypeStruct((B, 1), jnp.float32),
        grid_spec=pltpu.PrefetchScalarGridSpec(
            num_scalar_prefetch=0,
            grid=(grid,),
            in_specs=[
                pl.BlockSpec((bt, N), lambda i: (i, 0)),   # logits tile
                pl.BlockSpec((bt, 1), lambda i: (i, 0)),   # targets tile
            ],
            out_specs=pl.BlockSpec((bt, 1), lambda i: (i, 0)),
        ),
        compiler_params=pltpu.CompilerParams(
            dimension_semantics=("parallel",),
            vmem_limit_bytes=vmem_limit,
        ),
    )(pred, tgt2d)

    # Ragged-block rows were zeroed in-kernel; mean over the true batch size.
    return jnp.sum(per_row) / B


def label_smoothing_cross_entropy_ref(pred, target, smoothing=0.1):
    """Pure-JAX mirror of the PyTorch forward."""
    n = pred.shape[-1]
    logp = jax.nn.log_softmax(pred.astype(jnp.float32), axis=-1)
    true_dist = jnp.full_like(logp, smoothing / (n - 1))
    true_dist = true_dist.at[jnp.arange(pred.shape[0]), target].set(1.0 - smoothing)
    return jnp.mean(jnp.sum(-true_dist * logp, axis=-1))


if __name__ == "__main__":
    key = jax.random.PRNGKey(0)
    smoothing = 0.1

    # primary small case (single grid step)
    B, N = 8, 32
    kp, kt, kp2, kt2 = jax.random.split(key, 4)
    pred = jax.random.normal(kp, (B, N), dtype=jnp.float32)
    target = jax.random.randint(kt, (B,), 0, N, dtype=jnp.int32)

    loss = jax.block_until_ready(
        label_smoothing_cross_entropy(pred, target, smoothing))
    ref = label_smoothing_cross_entropy_ref(pred, target, smoothing)
    assert loss.shape == ()
    assert jnp.allclose(loss, ref, atol=1e-5, rtol=1e-5), (loss, ref)

    # unaligned batch / class count exercises the ragged-last-block mask path
    B2, N2 = 37, 200
    pred2 = jax.random.normal(kp2, (B2, N2), dtype=jnp.float32)
    target2 = jax.random.randint(kt2, (B2,), 0, N2, dtype=jnp.int32)
    loss2 = jax.block_until_ready(
        label_smoothing_cross_entropy(pred2, target2, smoothing))
    ref2 = label_smoothing_cross_entropy_ref(pred2, target2, smoothing)
    assert jnp.allclose(loss2, ref2, atol=1e-5, rtol=1e-5), (loss2, ref2)

    print("KERNEL_OK")
</pallas_src>

<mosaic_0001>
module attributes {stable_mosaic.version = 11 : i64} {
  func.func @_lsce_kernel(%arg0: i32, %arg1: memref<8x32xf32, #tpu.memory_space<vmem>>, %arg2: memref<8x1xi32, #tpu.memory_space<vmem>>, %arg3: memref<8x1xf32, #tpu.memory_space<vmem>>) attributes {dimension_semantics = [#tpu.dimension_semantics<parallel>], iteration_bounds = array<i64: 1>, scalar_prefetch = 0 : i64, scratch_operands = 0 : i64, tpu.core_type = #tpu.core_type<tc>, window_params = [{transform_indices = @transform_0, window_bounds = array<i64: 8, 32>}, {transform_indices = @transform_1, window_bounds = array<i64: 8, 1>}, {transform_indices = @transform_2, window_bounds = array<i64: 8, 1>}]} {
    %c0 = arith.constant 0 : index
    %c0_0 = arith.constant 0 : index
    %0 = vector.load %arg1[%c0, %c0_0] : memref<8x32xf32, #tpu.memory_space<vmem>>, vector<8x32xf32>
    %cst = arith.constant dense<0xFF800000> : vector<8xf32>
    %1 = vector.multi_reduction <maximumf>, %0, %cst [1] : vector<8x32xf32> to vector<8xf32>
    %2 = vector.shape_cast %1 : vector<8xf32> to vector<8x1xf32>
    %3 = vector.broadcast %2 : vector<8x1xf32> to vector<8x32xf32>
    %4 = arith.subf %0, %3 : vector<8x32xf32>
    %5 = math.exp %4 : vector<8x32xf32>
    %cst_1 = arith.constant dense<0.000000e+00> : vector<8xf32>
    %6 = vector.multi_reduction <add>, %5, %cst_1 [1] : vector<8x32xf32> to vector<8xf32>
    %7 = vector.shape_cast %6 : vector<8xf32> to vector<8x1xf32>
    %8 = math.log %7 : vector<8x1xf32>
    %9 = arith.addf %2, %8 : vector<8x1xf32>
    %cst_2 = arith.constant dense<0.000000e+00> : vector<8xf32>
    %10 = vector.multi_reduction <add>, %0, %cst_2 [1] : vector<8x32xf32> to vector<8xf32>
    %11 = vector.shape_cast %10 : vector<8xf32> to vector<8x1xf32>
    %12 = tpu.iota {dimensions = array<i32: 1>} : vector<8x32xi32>
    %c0_3 = arith.constant 0 : index
    %c0_4 = arith.constant 0 : index
    %13 = vector.load %arg2[%c0_3, %c0_4] : memref<8x1xi32, #tpu.memory_space<vmem>>, vector<8x1xi32>
    %14 = vector.broadcast %13 : vector<8x1xi32> to vector<8x32xi32>
    %15 = arith.cmpi eq, %12, %14 : vector<8x32xi32>
    %cst_5 = arith.constant 0.000000e+00 : f32
    %16 = vector.broadcast %cst_5 : f32 to vector<8x32xf32>
    %17 = arith.select %15, %0, %16 : vector<8x32xi1>, vector<8x32xf32>
    %cst_6 = arith.constant dense<0.000000e+00> : vector<8xf32>
    %18 = vector.multi_reduction <add>, %17, %cst_6 [1] : vector<8x32xf32> to vector<8xf32>
    %19 = vector.shape_cast %18 : vector<8xf32> to vector<8x1xf32>
    %20 = arith.subf %19, %9 : vector<8x1xf32>
    %cst_7 = arith.constant 3.200000e+01 : f32
    %21 = vector.broadcast %cst_7 : f32 to vector<8x1xf32>
    %22 = arith.mulf %21, %9 : vector<8x1xf32>
    %23 = arith.subf %11, %22 : vector<8x1xf32>
    %cst_8 = arith.constant -0.899999976 : f32
    %24 = vector.broadcast %cst_8 : f32 to vector<8x1xf32>
    %25 = arith.mulf %24, %20 : vector<8x1xf32>
    %26 = arith.subf %23, %20 : vector<8x1xf32>
    %cst_9 = arith.constant 0.0032258064 : f32
    %27 = vector.broadcast %cst_9 : f32 to vector<8x1xf32>
    %28 = arith.mulf %27, %26 : vector<8x1xf32>
    %29 = arith.subf %25, %28 : vector<8x1xf32>
    %c8_i32 = arith.constant 8 : i32
    %30 = arith.muli %arg0, %c8_i32 : i32
    %31 = tpu.iota {dimensions = array<i32: 0>} : vector<8x1xi32>
    %32 = vector.broadcast %30 : i32 to vector<8x1xi32>
    %33 = arith.addi %32, %31 : vector<8x1xi32>
    %c8_i32_10 = arith.constant 8 : i32
    %34 = vector.broadcast %c8_i32_10 : i32 to vector<8x1xi32>
    %35 = arith.cmpi slt, %33, %34 : vector<8x1xi32>
    %cst_11 = arith.constant 0.000000e+00 : f32
    %36 = vector.broadcast %cst_11 : f32 to vector<8x1xf32>
    %37 = arith.select %35, %29, %36 : vector<8x1xi1>, vector<8x1xf32>
    %c0_12 = arith.constant 0 : index
    %c0_13 = arith.constant 0 : index
    %38 = vector.load %arg3[%c0_12, %c0_13] : memref<8x1xf32, #tpu.memory_space<vmem>>, vector<8x1xf32>
    tpu.vector_store %arg3[%c0_12, %c0_13], %37 {strides = array<i32>} : memref<8x1xf32, #tpu.memory_space<vmem>>, vector<8x1xf32>,
    return
  }
  func.func @transform_0(%arg0: i32) -> (i32, i32) {
    %c0_i32 = arith.constant 0 : i32
    %c0_i32_0 = arith.constant 0 : i32
    return %arg0, %c0_i32 : i32, i32
  }
  func.func @transform_1(%arg0: i32) -> (i32, i32) {
    %c0_i32 = arith.constant 0 : i32
    %c0_i32_0 = arith.constant 0 : i32
    return %arg0, %c0_i32 : i32, i32
  }
  func.func @transform_2(%arg0: i32) -> (i32, i32) {
    %c0_i32 = arith.constant 0 : i32
    %c0_i32_0 = arith.constant 0 : i32
    return %arg0, %c0_i32 : i32, i32
  }
}

</mosaic_0001>

<llo_original>
// kernel: tpu_custom_call.1
$region0: #{tpu_custom_call.1}
  #allocation0 [shape = 'u32[]', space=smem, size = 0x4, offset = 0x4, fixed_abs, tag = 'smem constant byte address 0x4 - core index']
  #allocation1 [shape = 'u32[72,128]{1,0:T(1,128)}', space=vmem, size = 0x9000, scoped, tag = 'internal scratch']
  %s0 = inlined_call_operand.vmem [shape: f32[8,32], index: 0, kind: input, shape index: {}]
  %s1 = inlined_call_operand.vmem [shape: s32[8,1], index: 1, kind: input, shape index: {}]
  %s2 = inlined_call_operand.vmem [shape: f32[8,1], index: 2, kind: output, shape index: {}]
  %s3 = sld [smem:[#allocation0]]
  $region18: #{tpu_custom_call.1} parent=0
    _
  %s5 = ssub.s32 1, %s3
  %s6 = scalar_select 0, %s5, %s3
  // Predicated region
  $region2: #{tpu_custom_call.1} parent=0 // pred_check
    _
  $region3: #{tpu_custom_call.1} parent=0 // pred_check_branch
    %8 = sbr.rel (0) target = $region5
  $region4: #{tpu_custom_call.1} parent=0 // pred_region
    _
  $region5: #{tpu_custom_call.1} parent=0 // pred_fallthru
    _
  // Predicated region
  $region6: #{tpu_custom_call.1} parent=0 // pred_check
    _
  $region7: #{tpu_custom_call.1} parent=0 // pred_check_branch
    %10 = sbr.rel (0) target = $region9
  $region8: #{tpu_custom_call.1} parent=0 // pred_region
    _
  $region9: #{tpu_custom_call.1} parent=0 // pred_fallthru
    _
  %v11 = vld [vmem:[%s0] sm:$0xff]
  %vm12 = vcmask 261120
  %v13 = vsel %vm12, %v11, -inf
  %14 = vmax.xlane.f32.xlu0 %v13
  %v15 = vpop.xlane.xlu0 %14
  %v16 = vsub.f32 %v11, %v15
  %v17 = vmul.f32 %v16, 1.442695
  %v18 = vpow.pop %v17
  %v19 = vsel %vm12, %v18, 0.0
  %20 = vadd.xlane.f32.xlu0 %v19
  %v21 = vpop.xlane.xlu0 %20
  %v22 = vlog2.pop %v21
  %v23 = vmul.f32 %v22, 0.6931472
  %v24 = vadd.f32 %v15, %v23
  %v25 = vsel %vm12, %v11, 0.0
  %26 = vadd.xlane.f32.xlu0 %v25
  %v27 = vpop.xlane.xlu0 %26
  %v28 = vlaneseq
  %v29 = vand.u32 %v28, 127
  %v30 = vld [vmem:[%s1] sm:$0xff]
  %31 = vset.pattern.permute.xlu0 0
  %32 = vperm.xlu0 %31, %v30
  %v33 = vpop.permute.xlu0 %32
  %vm34 = vcmp.eq.s32.totalorder %v29, %v33
  %v35 = vsel %vm34, %v11, 0.0
  %v36 = vsel %vm12, %v35, 0.0
  %37 = vadd.xlane.f32.xlu0 %v36
  %v38 = vpop.xlane.xlu0 %37
  %v39 = vsub.f32 %v38, %v24
  %v40 = vmul.f32 %v24, 32.0
  %v41 = vsub.f32 %v27, %v40
  %v42 = vmul.f32 %v39, -0.9
  %v43 = vsub.f32 %v41, %v39
  %v44 = vmul.f32 %v43, 0.0032258064
  %v45 = vsub.f32 %v42, %v44
  %s46 = smul.u32 0, 8
  %v47 = vlaneseq
  %v48 = vshrl.u32 %v47, 7
  %v49 = vstv %s46
  %v50 = vadd.s32 %v49, %v48
  %vm51 = vcmp.lt.s32.totalorder %v50, 8
  %v52 = vsel %vm51, %v45, 0.0
  %vm53 = vcmask 7168
  %54 = vst.msk [vmem:[%s2] sm:$0xff] %vm53, %v52
  // Predicated region
  $region10: #{tpu_custom_call.1} parent=0 // pred_check
    _
  $region11: #{tpu_custom_call.1} parent=0 // pred_check_branch
    %56 = sbr.rel (0) target = $region13
  $region12: #{tpu_custom_call.1} parent=0 // pred_region
    _
  $region13: #{tpu_custom_call.1} parent=0 // pred_fallthru
    _
  // Predicated region
  $region14: #{tpu_custom_call.1} parent=0 // pred_check
    _
  $region15: #{tpu_custom_call.1} parent=0 // pred_check_branch
    %58 = sbr.rel (0) target = $region17
  $region16: #{tpu_custom_call.1} parent=0 // pred_region
    _
  $region17: #{tpu_custom_call.1} parent=0 // pred_fallthru
    _

</llo_original>
